<compile_context>
chip_gen: v7x
topology: tpu7x:2x2x1
jax: 0.10.0
libtpu: 0.0.40
codegen_flags: <defaults>
</compile_context>

<pallas_src>
import functools

import jax
import jax.numpy as jnp
from jax import lax
from jax.experimental import pallas as pl
from jax.experimental.pallas import tpu as pltpu


def _round_up(x, m):
    return ((x + m - 1) // m) * m


def _fuse_cat_kernel(meta, t_valid, n_identity, *refs):
    """meta[i] = (c0, c1, is_identity, t_in).

    refs = per-stream input blocks, output block, [DMA semaphore array].
    """
    n_in = len(meta)
    in_refs = refs[:n_in]
    out_ref = refs[n_in]
    sem = refs[n_in + 1] if n_identity > 0 else None
    t_pad = out_ref.shape[-1]

    # 1) Identity streams (T_i == T_max): push the copy onto the DMA engine so
    #    it runs for free underneath the MXU work of the resampled streams.
    copies = []
    si = 0
    for (c0, c1, identity, _), x_ref in zip(meta, in_refs):
        if identity:
            cp = pltpu.make_async_copy(x_ref, out_ref.at[:, c0:c1, :], sem.at[si])
            cp.start()
            copies.append(cp)
            si += 1

    # 2) Shorter streams: nearest resample as one 2-D MXU matmul per stream.
    #    The one-hot projection is built in-kernel (cheap VPU iota/compare):
    #    P[i, j] = 1  iff  i == floor(j*T_in/T_max)
    #                iff  i*T_max <= j*T_in < (i+1)*T_max   (exact, no int div).
    #    Pad columns j >= T_max are all-zero (sliced off in the wrapper).
    for (c0, c1, identity, t_in), x_ref in zip(meta, in_refs):
        if identity:
            continue
        bt, ci, ti = x_ref.shape
        row = lax.broadcasted_iota(jnp.int32, (ti, t_pad), 0)
        col = lax.broadcasted_iota(jnp.int32, (ti, t_pad), 1)
        lhs = row * t_valid
        rhs = col * ti
        p = ((lhs <= rhs) & (rhs < lhs + t_valid)).astype(x_ref.dtype)
        # Fold the batch tile into the MXU M dim; ci is a multiple of the
        # sublane pack so the reshape is a free view. One-hot P => accumulating
        # in the activation dtype is exact (no f32 intermediate, no cast pass).
        # TODO(synk): for very long T, tile the output time axis and feed each
        # 128/256-column tile only its contiguous K-window of x / P.
        x2 = x_ref[...].reshape(bt * ci, ti)
        up = jnp.dot(x2, p, preferred_element_type=out_ref.dtype)
        out_ref[:, c0:c1, :] = up.reshape(bt, ci, t_pad)

    # 3) Block the output writeback on the identity-stream DMAs.
    for cp in copies:
        cp.wait()


class AudioVisualFuse:
    def __init__(self, fuse_type, fuse_setting):
        self.fuse_type = fuse_type
        if fuse_type == "cat":
            # 'cat' has no learnable parameters
            self.out_channels = int(sum(fuse_setting["in_channels"]))
        elif fuse_type == "tcn":
            # TODO(synk): MultibranchTemporalConv1DNet source is not part of the
            # given module; only the fully specified 'cat' fuse path is implemented.
            raise NotImplementedError("fuse_type='tcn' not implemented here")
        else:
            raise NotImplementedError("unknown fuse_type")

    def __call__(self, audios, videos, length=None):
        xs = list(audios) + list(videos)
        B = int(xs[0].shape[0])
        dtype = xs[0].dtype
        assert jnp.issubdtype(dtype, jnp.floating), (
            "only float activations are supported (MXU one-hot resample path)")
        for x in xs:
            assert x.ndim == 3 and int(x.shape[0]) == B, "streams must share batch"
            assert x.dtype == dtype, "streams must share dtype"

        t_max = max(int(x.shape[-1]) for x in xs)
        t_pad = _round_up(t_max, 128)             # lane-dense output stores
        dsize = jnp.dtype(dtype).itemsize
        pack = max(8, 8 * (4 // dsize))           # sublane pack: 8 f32 / 16 bf16

        chans = [int(x.shape[1]) for x in xs]
        assert int(sum(chans)) == self.out_channels

        # --- pad to aligned, lane/sublane-dense blocks -------------------------
        xs_prep, meta = [], []
        c0 = 0
        for x, c in zip(xs, chans):
            t_in = int(x.shape[-1])
            identity = (t_in == t_max)
            c_pad = _round_up(c, pack)
            pad_t = (t_pad - t_in) if identity else 0   # full-width identity copy
            if c_pad != c or pad_t:
                x = jnp.pad(x, ((0, 0), (0, c_pad - c), (0, pad_t)))
            xs_prep.append(x)
            meta.append((c0, c0 + c_pad, identity, t_in))
            c0 += c_pad
        c_tot_pad = c0
        n_identity = sum(1 for m in meta if m[2])

        # --- generation-aware VMEM budget & batch tile --------------------------
        try:
            vmem_cap = int(pltpu.get_tpu_info().vmem_capacity_bytes)
        except Exception:
            vmem_cap = 64 << 20                   # conservative (v7x-like) fallback
        if vmem_cap <= (64 << 20):                # v7x: 64 MiB/TC, 2 TCs share grid
            budget, limit_clamp, min_steps = 24 << 20, 40 << 20, 4
        else:                                     # v5e/v6e: 128 MiB VMEM, single TC
            budget, limit_clamp, min_steps = 80 << 20, 100 << 20, 1

        per_b = c_tot_pad * t_pad * dsize         # output block per batch element
        per_b_tmp = 0                             # matmul 'up' intermediates
        proj_bytes = 0                            # in-kernel iota / one-hot temps
        for x, (cs, ce, identity, t_in) in zip(xs_prep, meta):
            per_b += (ce - cs) * int(x.shape[-1]) * dsize
            if not identity:
                per_b_tmp += (ce - cs) * t_pad * dsize
                proj_bytes += t_in * t_pad * (dsize + 8)

        avail = max(budget - proj_bytes, 2 * per_b + per_b_tmp)
        bt_cap = max(1, avail // (2 * per_b + per_b_tmp))
        if min_steps > 1 and B >= min_steps:      # keep both v7x TCs pipelined
            bt_cap = min(bt_cap, B // min_steps)
        bt = int(min(bt_cap, B))
        b_pad = _round_up(B, bt)                  # bt need not divide B
        if b_pad != B:
            xs_prep = [jnp.pad(x, ((0, b_pad - B), (0, 0), (0, 0))) for x in xs_prep]

        vmem_limit = int(min(
            max(2 * bt * per_b + bt * per_b_tmp + proj_bytes + (4 << 20), 16 << 20),
            limit_clamp))

        # --- specs / call --------------------------------------------------------
        in_specs = [
            pl.BlockSpec((bt, ce - cs, int(x.shape[-1])), lambda b: (b, 0, 0))
            for x, (cs, ce, _, _) in zip(xs_prep, meta)
        ]
        scratch = [pltpu.SemaphoreType.DMA((n_identity,))] if n_identity else []

        kernel = functools.partial(_fuse_cat_kernel, tuple(meta), t_max, n_identity)
        fused = pl.pallas_call(
            kernel,
            out_shape=jax.ShapeDtypeStruct((b_pad, c_tot_pad, t_pad), dtype),
            grid_spec=pltpu.PrefetchScalarGridSpec(
                num_scalar_prefetch=0,
                grid=(b_pad // bt,),
                in_specs=in_specs,
                out_specs=pl.BlockSpec((bt, c_tot_pad, t_pad), lambda b: (b, 0, 0)),
                scratch_shapes=scratch,
            ),
            compiler_params=pltpu.CompilerParams(
                dimension_semantics=("parallel",),
                vmem_limit_bytes=vmem_limit,
            ),
        )(*xs_prep)

        # --- strip batch / channel / time padding --------------------------------
        if b_pad != B:
            fused = fused[:B]
        if any((ce - cs) != c for (cs, ce, _, _), c in zip(meta, chans)):
            fused = jnp.concatenate(
                [fused[:, cs:cs + c, :t_max] for (cs, _, _, _), c in zip(meta, chans)],
                axis=1)
        elif t_pad != t_max:
            fused = fused[..., :t_max]
        return fused, length


if __name__ == "__main__":
    key = jax.random.PRNGKey(0)
    ka, kv1, kv2 = jax.random.split(key, 3)

    # audio already at T_max -> DMA identity fast path; videos: 4x / 2x upsample
    B = 2
    Ca, Ta = 16, 32
    Cv1, Tv1 = 8, 8
    Cv2, Tv2 = 8, 16
    audio = jax.random.normal(ka, (B, Ca, Ta), dtype=jnp.float32)
    video1 = jax.random.normal(kv1, (B, Cv1, Tv1), dtype=jnp.float32)
    video2 = jax.random.normal(kv2, (B, Cv2, Tv2), dtype=jnp.float32)

    fuse = AudioVisualFuse("cat", {"in_channels": [Ca, Cv1, Cv2]})
    out, length = fuse([audio], [video1, video2], length=None)
    out = jax.block_until_ready(out)

    # plain-JAX reference of the same semantics (F.interpolate 'nearest')
    def nearest_up(x, t_out):
        t_in = x.shape[-1]
        idx = (jnp.arange(t_out) * t_in) // t_out   # floor(j * Tin / Tout)
        return x[:, :, idx]

    ref = jnp.concatenate(
        [nearest_up(audio, Ta), nearest_up(video1, Ta), nearest_up(video2, Ta)],
        axis=1)

    assert out.shape == (B, Ca + Cv1 + Cv2, Ta), out.shape
    assert length is None
    assert jnp.allclose(out, ref, atol=1e-5), "kernel output mismatch"
    print("KERNEL_OK")
</pallas_src>

<mosaic_0001>
module attributes {stable_mosaic.version = 11 : i64} {
  func.func @_fuse_cat_kernel(%arg0: i32, %arg1: memref<2x16x128xf32, #tpu.memory_space<vmem>>, %arg2: memref<2x8x8xf32, #tpu.memory_space<vmem>>, %arg3: memref<2x8x16xf32, #tpu.memory_space<vmem>>, %arg4: memref<2x32x128xf32, #tpu.memory_space<vmem>>, %arg5: memref<1x!tpu.dma_semaphore, #tpu.memory_space<semaphore_mem>>) attributes {dimension_semantics = [#tpu.dimension_semantics<parallel>], iteration_bounds = array<i64: 1>, scalar_prefetch = 0 : i64, scratch_operands = 1 : i64, tpu.core_type = #tpu.core_type<tc>, window_params = [{transform_indices = @transform_0, window_bounds = array<i64: 2, 16, 128>}, {transform_indices = @transform_1, window_bounds = array<i64: 2, 8, 8>}, {transform_indices = @transform_2, window_bounds = array<i64: 2, 8, 16>}, {transform_indices = @transform_3, window_bounds = array<i64: 2, 32, 128>}]} {
    %c0_i32 = arith.constant 0 : i32
    %c0_i32_0 = arith.constant 0 : i32
    %c0_i32_1 = arith.constant 0 : i32
    %c0_i32_2 = arith.constant 0 : i32
    %0 = tpu.memref_slice %arg4[%c0_i32_0, %c0_i32_1, %c0_i32_2] : memref<2x32x128xf32, #tpu.memory_space<vmem>> -> memref<2x16x128xf32, #tpu.memory_space<vmem>>
    %1 = tpu.memref_slice %arg5[%c0_i32] : memref<1x!tpu.dma_semaphore, #tpu.memory_space<semaphore_mem>> -> memref<1x!tpu.dma_semaphore, #tpu.memory_space<semaphore_mem>>
    %2 = tpu.memref_squeeze %1 : memref<1x!tpu.dma_semaphore, #tpu.memory_space<semaphore_mem>> -> memref<!tpu.dma_semaphore, #tpu.memory_space<semaphore_mem>>
    tpu.enqueue_dma source(%arg1 : memref<2x16x128xf32, #tpu.memory_space<vmem>>) target(%0 : memref<2x16x128xf32, #tpu.memory_space<vmem>>) target_semaphore(%2 : memref<!tpu.dma_semaphore, #tpu.memory_space<semaphore_mem>>)
    %3 = tpu.iota {dimensions = array<i32: 0>} : vector<8x128xi32>
    %4 = tpu.iota {dimensions = array<i32: 1>} : vector<8x128xi32>
    %c32_i32 = arith.constant 32 : i32
    %5 = vector.broadcast %c32_i32 : i32 to vector<8x128xi32>
    %6 = arith.muli %3, %5 : vector<8x128xi32>
    %c8_i32 = arith.constant 8 : i32
    %7 = vector.broadcast %c8_i32 : i32 to vector<8x128xi32>
    %8 = arith.muli %4, %7 : vector<8x128xi32>
    %9 = arith.cmpi sle, %6, %8 : vector<8x128xi32>
    %c32_i32_3 = arith.constant 32 : i32
    %10 = vector.broadcast %c32_i32_3 : i32 to vector<8x128xi32>
    %11 = arith.addi %6, %10 : vector<8x128xi32>
    %12 = arith.cmpi slt, %8, %11 : vector<8x128xi32>
    %13 = arith.andi %9, %12 : vector<8x128xi1>
    %14 = arith.extui %13 : vector<8x128xi1> to vector<8x128xi32>
    %15 = arith.sitofp %14 : vector<8x128xi32> to vector<8x128xf32>
    %c0 = arith.constant 0 : index
    %c0_4 = arith.constant 0 : index
    %c0_5 = arith.constant 0 : index
    %16 = vector.load %arg2[%c0, %c0_4, %c0_5] : memref<2x8x8xf32, #tpu.memory_space<vmem>>, vector<2x8x8xf32>
    %17 = vector.shape_cast %16 : vector<2x8x8xf32> to vector<16x8xf32>
    %cst = arith.constant dense<0.000000e+00> : vector<16x128xf32>
    %18 = tpu.matmul %17, %15, %cst {dimension_numbers = #tpu.dot_dimension_numbers<[1], [0], [0], [1], [0, 0, 1, 1], [], []>} : vector<16x8xf32>, vector<8x128xf32>, vector<16x128xf32> -> vector<16x128xf32>
    %19 = vector.shape_cast %18 : vector<16x128xf32> to vector<2x8x128xf32>
    %c0_6 = arith.constant 0 : index
    %c16 = arith.constant 16 : index
    %c0_7 = arith.constant 0 : index
    %20 = vector.load %arg4[%c0_6, %c16, %c0_7] : memref<2x32x128xf32, #tpu.memory_space<vmem>>, vector<2x8x128xf32>
    tpu.vector_store %arg4[%c0_6, %c16, %c0_7], %19 {strides = array<i32>} : memref<2x32x128xf32, #tpu.memory_space<vmem>>, vector<2x8x128xf32>,
    %21 = tpu.iota {dimensions = array<i32: 0>} : vector<16x128xi32>
    %22 = tpu.iota {dimensions = array<i32: 1>} : vector<16x128xi32>
    %c32_i32_8 = arith.constant 32 : i32
    %23 = vector.broadcast %c32_i32_8 : i32 to vector<16x128xi32>
    %24 = arith.muli %21, %23 : vector<16x128xi32>
    %c16_i32 = arith.constant 16 : i32
    %25 = vector.broadcast %c16_i32 : i32 to vector<16x128xi32>
    %26 = arith.muli %22, %25 : vector<16x128xi32>
    %27 = arith.cmpi sle, %24, %26 : vector<16x128xi32>
    %c32_i32_9 = arith.constant 32 : i32
    %28 = vector.broadcast %c32_i32_9 : i32 to vector<16x128xi32>
    %29 = arith.addi %24, %28 : vector<16x128xi32>
    %30 = arith.cmpi slt, %26, %29 : vector<16x128xi32>
    %31 = arith.andi %27, %30 : vector<16x128xi1>
    %32 = arith.extui %31 : vector<16x128xi1> to vector<16x128xi32>
    %33 = arith.sitofp %32 : vector<16x128xi32> to vector<16x128xf32>
    %c0_10 = arith.constant 0 : index
    %c0_11 = arith.constant 0 : index
    %c0_12 = arith.constant 0 : index
    %34 = vector.load %arg3[%c0_10, %c0_11, %c0_12] : memref<2x8x16xf32, #tpu.memory_space<vmem>>, vector<2x8x16xf32>
    %35 = vector.shape_cast %34 : vector<2x8x16xf32> to vector<16x16xf32>
    %cst_13 = arith.constant dense<0.000000e+00> : vector<16x128xf32>
    %36 = tpu.matmul %35, %33, %cst_13 {dimension_numbers = #tpu.dot_dimension_numbers<[1], [0], [0], [1], [0, 0, 1, 1], [], []>} : vector<16x16xf32>, vector<16x128xf32>, vector<16x128xf32> -> vector<16x128xf32>
    %37 = vector.shape_cast %36 : vector<16x128xf32> to vector<2x8x128xf32>
    %c0_14 = arith.constant 0 : index
    %c24 = arith.constant 24 : index
    %c0_15 = arith.constant 0 : index
    %38 = vector.load %arg4[%c0_14, %c24, %c0_15] : memref<2x32x128xf32, #tpu.memory_space<vmem>>, vector<2x8x128xf32>
    tpu.vector_store %arg4[%c0_14, %c24, %c0_15], %37 {strides = array<i32>} : memref<2x32x128xf32, #tpu.memory_space<vmem>>, vector<2x8x128xf32>,
    %c0_i32_16 = arith.constant 0 : i32
    %c0_i32_17 = arith.constant 0 : i32
    %c0_i32_18 = arith.constant 0 : i32
    %c0_i32_19 = arith.constant 0 : i32
    %39 = tpu.memref_slice %arg4[%c0_i32_17, %c0_i32_18, %c0_i32_19] : memref<2x32x128xf32, #tpu.memory_space<vmem>> -> memref<2x16x128xf32, #tpu.memory_space<vmem>>
    %40 = tpu.memref_slice %arg5[%c0_i32_16] : memref<1x!tpu.dma_semaphore, #tpu.memory_space<semaphore_mem>> -> memref<1x!tpu.dma_semaphore, #tpu.memory_space<semaphore_mem>>
    %41 = tpu.memref_squeeze %40 : memref<1x!tpu.dma_semaphore, #tpu.memory_space<semaphore_mem>> -> memref<!tpu.dma_semaphore, #tpu.memory_space<semaphore_mem>>
    tpu.wait_dma2 semaphore(%41 : memref<!tpu.dma_semaphore, #tpu.memory_space<semaphore_mem>>) src(%arg1 : memref<2x16x128xf32, #tpu.memory_space<vmem>>) dst(%39 : memref<2x16x128xf32, #tpu.memory_space<vmem>>)
    return
  }
  func.func @transform_0(%arg0: i32) -> (i32, i32, i32) {
    %c0_i32 = arith.constant 0 : i32
    %c0_i32_0 = arith.constant 0 : i32
    %c0_i32_1 = arith.constant 0 : i32
    return %arg0, %c0_i32, %c0_i32_0 : i32, i32, i32
  }
  func.func @transform_1(%arg0: i32) -> (i32, i32, i32) {
    %c0_i32 = arith.constant 0 : i32
    %c0_i32_0 = arith.constant 0 : i32
    %c0_i32_1 = arith.constant 0 : i32
    return %arg0, %c0_i32, %c0_i32_0 : i32, i32, i32
  }
  func.func @transform_2(%arg0: i32) -> (i32, i32, i32) {
    %c0_i32 = arith.constant 0 : i32
    %c0_i32_0 = arith.constant 0 : i32
    %c0_i32_1 = arith.constant 0 : i32
    return %arg0, %c0_i32, %c0_i32_0 : i32, i32, i32
  }
  func.func @transform_3(%arg0: i32) -> (i32, i32, i32) {
    %c0_i32 = arith.constant 0 : i32
    %c0_i32_0 = arith.constant 0 : i32
    %c0_i32_1 = arith.constant 0 : i32
    return %arg0, %c0_i32, %c0_i32_0 : i32, i32, i32
  }
}

</mosaic_0001>

<llo_original>
// kernel: tpu_custom_call.1
$region0: #{tpu_custom_call.1}
  #allocation0 [shape = 'u32[]', space=smem, size = 0x4, offset = 0x4, fixed_abs, tag = 'smem constant byte address 0x4 - core index']
  #allocation1 [shape = 'u32[144,128]{1,0:T(1,128)}', space=vmem, size = 0x12000, scoped, tag = 'internal scratch']
  #allocation2 [shape = 's32[1]{0}', space=sflag, size = 0x4, scoped, tag = 'scratch operand']
  #allocation10 [shape = 's32[]', space=sflag, size = 0x4, offset = 0, fixed_abs, tag = 'sflag constant byte address 0x0 - dummy sync flag']
  %s0 = inlined_call_operand.hbm [shape: f32[2,16,128], index: 0, kind: input, shape index: {}]
  %s1 = inlined_call_operand.hbm [shape: f32[2,8,8], index: 1, kind: input, shape index: {}]
  %s2 = inlined_call_operand.hbm [shape: f32[2,8,16], index: 2, kind: input, shape index: {}]
  %s3 = inlined_call_operand.hbm [shape: f32[2,32,128], index: 3, kind: output, shape index: {}]
  %s4 = sld [smem:[#allocation0]]
  $region68: #{tpu_custom_call.1} parent=0
    _
  %s6 = ssub.s32 1, %s4
  %s7 = scalar_select 0, %s6, %s4
  $region1: #{tpu_custom_call.1} parent=0
    #allocation3 [shape = 'u8[16384]{0}', space=vmem, size = 0x4000, scoped, tag = 'input window, operand 0, single buffered']
    #allocation4 [shape = 's32[1]{0}', space=sflag, size = 0x4, scoped, tag = 'scoped memory for tpu_custom_call.1']
    #allocation5 [shape = 's32[1]{0}', space=sflag, size = 0x4, scoped, tag = 'scoped memory for tpu_custom_call.1']
    #allocation6 [shape = 'u8[8192]{0}', space=vmem, size = 0x2000, scoped, tag = 'input window, operand 1, single buffered']
    #allocation7 [shape = 's32[1]{0}', space=sflag, size = 0x4, scoped, tag = 'scoped memory for tpu_custom_call.1']
    #allocation8 [shape = 'u8[8192]{0}', space=vmem, size = 0x2000, scoped, tag = 'input window, operand 2, single buffered']
    #allocation9 [shape = 'u8[32768]{0}', space=vmem, size = 0x8000, scoped, tag = 'output window, operand 0, single buffered']
    %8 = vsyncpa [#allocation4], 0
    %9 = vsyncpa [#allocation7], 0
    %10 = vsyncpa [#allocation5], 0
    // Predicated region
    $region2: #{tpu_custom_call.1} parent=1 // pred_check
      _
    $region3: #{tpu_custom_call.1} parent=1 // pred_check_branch
      %12 = sbr.rel (0) target = $region5
    $region4: #{tpu_custom_call.1} parent=1 // pred_region
      %s14 = ssub.s32 512, 512
      %15 = vsyncadd [#allocation4], %s14
      %s16 = sshll.u32 [#allocation3], 4
      %s17 = int_to_ptr.vmem [resolvable:$true] %s16
      %22 = dma.hbm_to_vmem [thread:$0]  %s0, 512, %s17, [#allocation4], 128, 128, 8
    $region5: #{tpu_custom_call.1} parent=1 // pred_fallthru
      _
    // Predicated region
    $region6: #{tpu_custom_call.1} parent=1 // pred_check
      _
    $region7: #{tpu_custom_call.1} parent=1 // pred_check_branch
      %24 = sbr.rel (0) target = $region9
    $region8: #{tpu_custom_call.1} parent=1 // pred_region
      %s26 = ssub.s32 256, 256
      %27 = vsyncadd [#allocation7], %s26
      %s28 = sshll.u32 [#allocation6], 4
      %s29 = int_to_ptr.vmem [resolvable:$true] %s28
      %34 = dma.hbm_to_vmem [thread:$0]  %s1, 256, %s29, [#allocation7], 128, 128, 8
    $region9: #{tpu_custom_call.1} parent=1 // pred_fallthru
      _
    // Predicated region
    $region10: #{tpu_custom_call.1} parent=1 // pred_check
      _
    $region11: #{tpu_custom_call.1} parent=1 // pred_check_branch
      %36 = sbr.rel (0) target = $region13
    $region12: #{tpu_custom_call.1} parent=1 // pred_region
      %s38 = ssub.s32 256, 256
      %39 = vsyncadd [#allocation7], %s38
      %s40 = sshll.u32 [#allocation8], 4
      %s41 = int_to_ptr.vmem [resolvable:$true] %s40
      %46 = dma.hbm_to_vmem [thread:$0]  %s2, 256, %s41, [#allocation7], 128, 128, 8
    $region13: #{tpu_custom_call.1} parent=1 // pred_fallthru
      _
    // Predicated region
    $region14: #{tpu_custom_call.1} parent=1 // pred_check
      _
    $region15: #{tpu_custom_call.1} parent=1 // pred_check_branch
      %48 = sbr.rel (0) target = $region17
    $region16: #{tpu_custom_call.1} parent=1 // pred_region
      %49 = dma.done [#allocation4], 512
    $region17: #{tpu_custom_call.1} parent=1 // pred_fallthru
      _
    // Predicated region
    $region18: #{tpu_custom_call.1} parent=1 // pred_check
      _
    $region19: #{tpu_custom_call.1} parent=1 // pred_check_branch
      %51 = sbr.rel (0) target = $region21
    $region20: #{tpu_custom_call.1} parent=1 // pred_region
      %52 = dma.done [#allocation7], 256
    $region21: #{tpu_custom_call.1} parent=1 // pred_fallthru
      _
    // Predicated region
    $region22: #{tpu_custom_call.1} parent=1 // pred_check
      _
    $region23: #{tpu_custom_call.1} parent=1 // pred_check_branch
      %54 = sbr.rel (0) target = $region25
    $region24: #{tpu_custom_call.1} parent=1 // pred_region
      %55 = dma.done [#allocation7], 256
    $region25: #{tpu_custom_call.1} parent=1 // pred_fallthru
      _
    %p57 = scmp.lt.u32.totalorder 16, 8
    %p58 = pneg %p57
    // Predicated region
    $region26: #{tpu_custom_call.1} parent=1 // pred_check
      _
    $region27: #{tpu_custom_call.1} parent=1 // pred_check_branch
      %60 = sbr.rel (%p57) target = $region29
    $region28: #{tpu_custom_call.1} parent=1 // pred_region
      %s77 = sand.u32 16, 7
      %p78 = scmp.eq.s32.totalorder %s77, 0
      // Predicated region
      $region41: #{tpu_custom_call.1} parent=28 // pred_check
        %p79 = pneg %p78
      $region42: #{tpu_custom_call.1} parent=28 // pred_check_branch
        %81 = sbr.rel (%p79) target = $region44
      $region43: #{tpu_custom_call.1} parent=28 // pred_region
        loop: start=0, step=1, limit=1
        $region45: #{tpu_custom_call.1} parent=43 // loop_pre_header
          _
        $region46: #{tpu_custom_call.1} parent=43 // loop_header
          %s83 = sphi 0, %s87
          %p84 = scmp.ge.s32.totalorder %s83, 1
          %s88 = sphi [#allocation3], [#allocation3]
          %s89 = sphi [#allocation9], [#allocation9]
        $region47: #{tpu_custom_call.1} parent=43 // loop_header_branch
          %86 = sbr.rel (%p84) target = $region51
        $region48: #{tpu_custom_call.1} parent=43 // loop_body
          %v90 = vld [vmem:[%s88] sm:$0xff]
          %91 = vst [vmem:[%s89] sm:$0xff] %v90
          %v92 = vld [vmem:[%s88 + $0x8] sm:$0xff]
          %93 = vst [vmem:[%s89 + $0x8] sm:$0xff] %v92
          %v94 = vld [vmem:[%s88 + $0x10] sm:$0xff]
          %95 = vst [vmem:[%s89 + $0x20] sm:$0xff] %v94
          %v96 = vld [vmem:[%s88 + $0x18] sm:$0xff]
          %97 = vst [vmem:[%s89 + $0x28] sm:$0xff] %v96
        $region49: #{tpu_custom_call.1} parent=43 // loop_footer
          %s87 = sadd.s32 1, %s83
        $region50: #{tpu_custom_call.1} parent=43 // loop_footer_branch
          %82 = sbr.rel target = $region46
        $region51: #{tpu_custom_call.1} parent=43 // loop_exit
          _
      $region44: #{tpu_custom_call.1} parent=28 // pred_fallthru
        _
      %p98 = pneg %p78
      // Predicated region
      $region52: #{tpu_custom_call.1} parent=28 // pred_check
        _
      $region53: #{tpu_custom_call.1} parent=28 // pred_check_branch
        %100 = sbr.rel (%p78) target = $region55
      $region54: #{tpu_custom_call.1} parent=28 // pred_region
        %s101 = sand.u32 16, 7
      $region55: #{tpu_custom_call.1} parent=28 // pred_fallthru
        _
    $region29: #{tpu_custom_call.1} parent=1 // pred_fallthru
      _
    // Predicated region
    $region30: #{tpu_custom_call.1} parent=1 // pred_check
      %p61 = pneg %p57
    $region31: #{tpu_custom_call.1} parent=1 // pred_check_branch
      %63 = sbr.rel (%p61) target = $region33
    $region32: #{tpu_custom_call.1} parent=1 // pred_region
      %s64 = sshllo.u32 0, 16
      loop: start=0, step=1, limit=1
      $region34: #{tpu_custom_call.1} parent=32 // loop_pre_header
        _
      $region35: #{tpu_custom_call.1} parent=32 // loop_header
        %s66 = sphi 0, %s70
        %p67 = scmp.ge.s32.totalorder %s66, 1
        %s71 = sphi [#allocation3], [#allocation3]
        %s72 = sphi [#allocation9], [#allocation9]
      $region36: #{tpu_custom_call.1} parent=32 // loop_header_branch
        %69 = sbr.rel (%p67) target = $region40
      $region37: #{tpu_custom_call.1} parent=32 // loop_body
        %v73 = vld [vmem:[%s71] sm:%s64]
        %74 = vst [vmem:[%s72] sm:%s64] %v73
        %v75 = vld [vmem:[%s71 + $0x10] sm:%s64]
        %76 = vst [vmem:[%s72 + $0x20] sm:%s64] %v75
      $region38: #{tpu_custom_call.1} parent=32 // loop_footer
        %s70 = sadd.s32 1, %s66
      $region39: #{tpu_custom_call.1} parent=32 // loop_footer_branch
        %65 = sbr.rel target = $region35
      $region40: #{tpu_custom_call.1} parent=32 // loop_exit
        _
    $region33: #{tpu_custom_call.1} parent=1 // pred_fallthru
      _
    // Predicated region
    $region56: #{tpu_custom_call.1} parent=1 // pred_check
      _
    $region57: #{tpu_custom_call.1} parent=1 // pred_check_branch
      %104 = sbr.rel (0) target = $region59
    $region58: #{tpu_custom_call.1} parent=1 // pred_region
      %105 = vsyncadd [#allocation2], 512
    $region59: #{tpu_custom_call.1} parent=1 // pred_fallthru
      _
    %v106 = vlaneseq
    %v107 = vshrl.u32 %v106, 7
    %v108 = vlaneseq
    %v109 = vand.u32 %v108, 127
    %v110 = vmul.u32 %v107, 32
    %v111 = vmul.u32 %v109, 8
    %vm112 = vcmp.le.s32.totalorder %v110, %v111
    %v113 = vadd.s32 %v110, 32
    %vm114 = vcmp.lt.s32.totalorder %v111, %v113
    %vm115 = vmand %vm112, %vm114
    %v116 = vsel %vm115, 1, 0
    %v117 = vcvt.s32.f32 %v116
    %v118 = vld [vmem:[#allocation6] sm:$0xff]
    %v119 = vld [vmem:[#allocation6 + $0x8] sm:$0xff]
    %vm120 = vcmask 64512
    %v122 = vsel %vm120, %v118, 0
    %v125 = vsel %vm120, %v119, 0
    %127 = vmatprep.subr.mxu0 0.0
    %128 = vmatpush1.msra.mxu0 %v117
    %129 = vmatprep.subr.mxu0 0.0
    %130 = vmatpush1.msra.mxu0 0.0
    %131 = vmatprep.subr.mxu0 0.0
    %132 = vmatpush1.msra.mxu0 0.0
    %133 = vmatprep.subr.mxu0 0.0
    %134 = vmatpush1.msra.mxu0 0.0
    %135 = vmatprep.subr.mxu0 0.0
    %136 = vmatpush1.msra.mxu0 0.0
    %137 = vmatprep.subr.mxu0 0.0
    %138 = vmatpush1.msra.mxu0 0.0
    %139 = vmatprep.subr.mxu0 0.0
    %140 = vmatpush1.msra.mxu0 0.0
    %141 = vmatprep.subr.mxu0 0.0
    %142 = vmatpush1.msra.mxu0 0.0
    %143 = vmatprep.subr.mxu0 0.0
    %144 = vmatpush1.msra.mxu0 0.0
    %145 = vmatprep.subr.mxu0 0.0
    %146 = vmatpush1.msra.mxu0 0.0
    %147 = vmatprep.subr.mxu0 0.0
    %148 = vmatpush1.msra.mxu0 0.0
    %149 = vmatprep.subr.mxu0 0.0
    %150 = vmatpush1.msra.mxu0 0.0
    %151 = vmatprep.subr.mxu0 0.0
    %152 = vmatpush1.msra.mxu0 0.0
    %153 = vmatprep.subr.mxu0 0.0
    %154 = vmatpush1.msra.mxu0 0.0
    %155 = vmatprep.subr.mxu0 0.0
    %156 = vmatpush1.msra.mxu0 0.0
    %157 = vmatprep.subr.mxu0 0.0
    %158 = vmatpush1.msra.mxu0 0.0
    %159 = vmatprep.subr.mxu0 0.0
    %160 = vmatpush1.msra.mxu0 0.0
    %161 = vmatprep.subr.mxu0 0.0
    %162 = vmatpush1.msra.mxu0 0.0
    %163 = vmatprep.subr.mxu0 0.0
    %164 = vmatpush1.msra.mxu0 0.0
    %165 = vmatprep.subr.mxu0 0.0
    %166 = vmatpush1.msra.mxu0 0.0
    %167 = vmatprep.subr.mxu0 0.0
    %168 = vmatpush1.msra.mxu0 0.0
    %169 = vmatprep.subr.mxu0 0.0
    %170 = vmatpush1.msra.mxu0 0.0
    %171 = vmatprep.subr.mxu0 0.0
    %172 = vmatpush1.msra.mxu0 0.0
    %173 = vmatprep.subr.mxu0 0.0
    %174 = vmatpush1.msra.mxu0 0.0
    %175 = vmatprep.subr.mxu0 0.0
    %176 = vmatpush1.msra.mxu0 0.0
    %177 = vmatprep.subr.mxu0 0.0
    %178 = vmatpush1.msra.mxu0 0.0
    %179 = vmatprep.subr.mxu0 0.0
    %180 = vmatpush1.msra.mxu0 0.0
    %181 = vmatprep.subr.mxu0 0.0
    %182 = vmatpush1.msra.mxu0 0.0
    %183 = vmatprep.subr.mxu0 0.0
    %184 = vmatpush1.msra.mxu0 0.0
    %185 = vmatprep.subr.mxu0 0.0
    %186 = vmatpush1.msra.mxu0 0.0
    %187 = vmatprep.subr.mxu0 0.0
    %188 = vmatpush1.msra.mxu0 0.0
    %189 = vmatprep.subr.mxu0 0.0
    %190 = vmatpush1.msra.mxu0 0.0
    %191 = vmatprep.mubr.f32.mxu0 0.0
    %192 = vmatmul.mubr.f32.gmra.mrb[0].mxu0 %v122
    %v193 = vpop.f32.mrb[0].mxu0
    %v194 = vadd.f32 0.0, %v193
    %v195 = vpop.f32.mrb[0].mxu0
    %196 = vmatprep.mubr.f32.mxu0 0.0
    %197 = vmatmul.mubr.f32.gmra.mrb[0].mxu0 %v125
    %v198 = vpop.f32.mrb[0].mxu0
    %v199 = vadd.f32 0.0, %v198
    %v200 = vpop.f32.mrb[0].mxu0
    %201 = vdwg.mxu0
    %202 = vst [vmem:[#allocation9 + $0x10] sm:$0xff] %v194
    %203 = vst [vmem:[#allocation9 + $0x30] sm:$0xff] %v199
    %v204 = vadd.s32 %v107, 8
    %v205 = vmul.u32 %v204, 32
    %v206 = vmul.u32 %v109, 16
    %vm207 = vcmp.le.s32.totalorder %v110, %v206
    %vm208 = vcmp.le.s32.totalorder %v205, %v206
    %v209 = vadd.s32 %v205, 32
    %vm210 = vcmp.lt.s32.totalorder %v206, %v113
    %vm211 = vcmp.lt.s32.totalorder %v206, %v209
    %vm212 = vmand %vm207, %vm210
    %vm213 = vmand %vm208, %vm211
    %v214 = vsel %vm212, 1, 0
    %v215 = vsel %vm213, 1, 0
    %v216 = vcvt.s32.f32 %v214
    %v217 = vcvt.s32.f32 %v215
    %v218 = vld [vmem:[#allocation8] sm:$0xff]
    %v219 = vld [vmem:[#allocation8 + $0x8] sm:$0xff]
    %vm220 = vcmask 130048
    %v222 = vsel %vm220, %v218, 0
    %v225 = vsel %vm220, %v219, 0
    %227 = vmatprep.subr.mxu0 0.0
    %228 = vmatpush1.msra.mxu0 %v216
    %229 = vmatprep.subr.mxu0 0.0
    %230 = vmatpush1.msra.mxu0 %v217
    %231 = vmatprep.subr.mxu0 0.0
    %232 = vmatpush1.msra.mxu0 0.0
    %233 = vmatprep.subr.mxu0 0.0
    %234 = vmatpush1.msra.mxu0 0.0
    %235 = vmatprep.subr.mxu0 0.0
    %236 = vmatpush1.msra.mxu0 0.0
    %237 = vmatprep.subr.mxu0 0.0
    %238 = vmatpush1.msra.mxu0 0.0
    %239 = vmatprep.subr.mxu0 0.0
    %240 = vmatpush1.msra.mxu0 0.0
    %241 = vmatprep.subr.mxu0 0.0
    %242 = vmatpush1.msra.mxu0 0.0
    %243 = vmatprep.subr.mxu0 0.0
    %244 = vmatpush1.msra.mxu0 0.0
    %245 = vmatprep.subr.mxu0 0.0
    %246 = vmatpush1.msra.mxu0 0.0
    %247 = vmatprep.subr.mxu0 0.0
    %248 = vmatpush1.msra.mxu0 0.0
    %249 = vmatprep.subr.mxu0 0.0
    %250 = vmatpush1.msra.mxu0 0.0
    %251 = vmatprep.subr.mxu0 0.0
    %252 = vmatpush1.msra.mxu0 0.0
    %253 = vmatprep.subr.mxu0 0.0
    %254 = vmatpush1.msra.mxu0 0.0
    %255 = vmatprep.subr.mxu0 0.0
    %256 = vmatpush1.msra.mxu0 0.0
    %257 = vmatprep.subr.mxu0 0.0
    %258 = vmatpush1.msra.mxu0 0.0
    %259 = vmatprep.subr.mxu0 0.0
    %260 = vmatpush1.msra.mxu0 0.0
    %261 = vmatprep.subr.mxu0 0.0
    %262 = vmatpush1.msra.mxu0 0.0
    %263 = vmatprep.subr.mxu0 0.0
    %264 = vmatpush1.msra.mxu0 0.0
    %265 = vmatprep.subr.mxu0 0.0
    %266 = vmatpush1.msra.mxu0 0.0
    %267 = vmatprep.subr.mxu0 0.0
    %268 = vmatpush1.msra.mxu0 0.0
    %269 = vmatprep.subr.mxu0 0.0
    %270 = vmatpush1.msra.mxu0 0.0
    %271 = vmatprep.subr.mxu0 0.0
    %272 = vmatpush1.msra.mxu0 0.0
    %273 = vmatprep.subr.mxu0 0.0
    %274 = vmatpush1.msra.mxu0 0.0
    %275 = vmatprep.subr.mxu0 0.0
    %276 = vmatpush1.msra.mxu0 0.0
    %277 = vmatprep.subr.mxu0 0.0
    %278 = vmatpush1.msra.mxu0 0.0
    %279 = vmatprep.subr.mxu0 0.0
    %280 = vmatpush1.msra.mxu0 0.0
    %281 = vmatprep.subr.mxu0 0.0
    %282 = vmatpush1.msra.mxu0 0.0
    %283 = vmatprep.subr.mxu0 0.0
    %284 = vmatpush1.msra.mxu0 0.0
    %285 = vmatprep.subr.mxu0 0.0
    %286 = vmatpush1.msra.mxu0 0.0
    %287 = vmatprep.subr.mxu0 0.0
    %288 = vmatpush1.msra.mxu0 0.0
    %289 = vmatprep.subr.mxu0 0.0
    %290 = vmatpush1.msra.mxu0 0.0
    %291 = vmatprep.mubr.f32.mxu0 0.0
    %292 = vmatmul.mubr.f32.gmra.mrb[0].mxu0 %v222
    %v293 = vpop.f32.mrb[0].mxu0
    %v294 = vadd.f32 0.0, %v293
    %v295 = vpop.f32.mrb[0].mxu0
    %296 = vmatprep.mubr.f32.mxu0 0.0
    %297 = vmatmul.mubr.f32.gmra.mrb[0].mxu0 %v225
    %v298 = vpop.f32.mrb[0].mxu0
    %v299 = vadd.f32 0.0, %v298
    %v300 = vpop.f32.mrb[0].mxu0
    %301 = vdwg.mxu0
    %302 = vst [vmem:[#allocation9 + $0x18] sm:$0xff] %v294
    %303 = vst [vmem:[#allocation9 + $0x38] sm:$0xff] %v299
    %s304 = smul.u32 2, 16
    %s305 = smul.u32 %s304, 1
    %s306 = sshll.u32 %s305, 4
    %307 = dma.done [#allocation2], %s306
    // Predicated region
    $region60: #{tpu_custom_call.1} parent=1 // pred_check
      _
    $region61: #{tpu_custom_call.1} parent=1 // pred_check_branch
      %309 = sbr.rel (0) target = $region63
    $region62: #{tpu_custom_call.1} parent=1 // pred_region
      %s311 = ssub.s32 1024, 1024
      %312 = vsyncadd [#allocation5], %s311
      %s313 = sshll.u32 [#allocation9], 4
      %s314 = int_to_ptr.vmem [resolvable:$true] %s313
      %319 = dma.vmem_to_hbm [thread:$0]  %s314, 1024, %s3, [#allocation5], 128, 128, 8
    $region63: #{tpu_custom_call.1} parent=1 // pred_fallthru
      _
    // Predicated region
    $region64: #{tpu_custom_call.1} parent=1 // pred_check
      _
    $region65: #{tpu_custom_call.1} parent=1 // pred_check_branch
      %321 = sbr.rel (0) target = $region67
    $region66: #{tpu_custom_call.1} parent=1 // pred_region
      %322 = dma.done [#allocation5], 1024
    $region67: #{tpu_custom_call.1} parent=1 // pred_fallthru
      _
    %323 = vsyncpa [#allocation4], 1
    %324 = vsyncpa [#allocation7], 1
    %325 = vsyncpa [#allocation5], 1
  %326 = vsyncmov [#allocation2]
  %s327 = vpop.sfrf %326
  %p328 = scmp.eq.s32.totalorder %s327, 0
  %p329 = pneg %p328
  %331 = shalt.err (%p329)

</llo_original>
